<compile_context>
chip_gen: v6e
topology: v6e:2x2x1
jax: 0.10.0
libtpu: 0.0.40
codegen_flags: <defaults>
</compile_context>

<pallas_src>
import jax
import jax.numpy as jnp
from jax.experimental import pallas as pl
from jax.experimental.pallas import tpu as pltpu

_LANE = 128


def _mlp_finalize(avg, mx, w1t_ref, w2t_ref):
    """Shared MLP + sigmoid on pooled stats.  avg/mx: (Bb, C) f32 -> (Bb, C) f32."""
    bb = avg.shape[0]
    pooled = jnp.concatenate([avg, mx], axis=0)                # (2*Bb, C)
    w1t = w1t_ref[...].astype(jnp.float32)                     # (C, H)
    w2t = w2t_ref[...].astype(jnp.float32)                     # (H, C)
    h = jnp.maximum(
        jnp.dot(pooled, w1t, preferred_element_type=jnp.float32), 0.0)
    out = jnp.dot(h, w2t, preferred_element_type=jnp.float32)  # (2*Bb, C)
    return jax.nn.sigmoid(out[:bb] + out[bb:])                 # (Bb, C)


def _make_single_step_kernel(L):
    """Whole L fits in one block: reduce + MLP in a single grid step, no scratch."""
    inv_l = 1.0 / L

    def kernel(x_ref, w1t_ref, w2t_ref, o_ref):
        chunk = x_ref[...]                                     # (Bb, C, L)
        s = jnp.sum(chunk, axis=-1, dtype=jnp.float32)
        m = jnp.max(chunk, axis=-1).astype(jnp.float32)
        att = _mlp_finalize(s * jnp.float32(inv_l), m, w1t_ref, w2t_ref)
        o_ref[0] = att.astype(o_ref.dtype)                     # o_ref: (1, Bb, C)

    return kernel


def _make_streaming_kernel(L, Lt, need_mask):
    """Tiled streaming reduction over L with f32 accumulators in scratch."""
    inv_l = 1.0 / L

    def kernel(x_ref, w1t_ref, w2t_ref, o_ref, sum_acc, max_acc):
        li = pl.program_id(1)
        nl = pl.num_programs(1)

        @pl.when(li == 0)
        def _():
            sum_acc[...] = jnp.zeros_like(sum_acc)
            max_acc[...] = jnp.full_like(max_acc, -jnp.inf)

        def _accumulate(chunk_s, chunk_m):
            sum_acc[...] += jnp.sum(chunk_s, axis=-1, dtype=jnp.float32)
            max_acc[...] = jnp.maximum(
                max_acc[...], jnp.max(chunk_m, axis=-1).astype(jnp.float32))

        if need_mask:
            # Full tiles: pure load + reduce (no mask arithmetic in the hot loop).
            @pl.when(li < nl - 1)
            def _():
                chunk = x_ref[...]
                _accumulate(chunk, chunk)

            # Last (partial) tile only: mask the padded lanes (stale VMEM) with
            # 0 for the sum and -inf for the max; mean divides by the true L.
            @pl.when(li == nl - 1)
            def _():
                chunk = x_ref[...]
                lane = jax.lax.broadcasted_iota(jnp.int32, chunk.shape, 2)
                valid = (li * Lt + lane) < L
                _accumulate(
                    jnp.where(valid, chunk, jnp.zeros_like(chunk)),
                    jnp.where(valid, chunk, jnp.full_like(chunk, -jnp.inf)))
        else:
            chunk = x_ref[...]
            _accumulate(chunk, chunk)

        # Finalize: tiny shared MLP + sigmoid, once per output block.
        @pl.when(li == nl - 1)
        def _():
            att = _mlp_finalize(sum_acc[...] * jnp.float32(inv_l), max_acc[...],
                                w1t_ref, w2t_ref)
            o_ref[0] = att.astype(o_ref.dtype)                 # o_ref: (1, Bb, C)

    return kernel


def _pick_bb(B, C, L, itemsize, budget):
    """Largest divisor of B with a minimal block within budget and (when B >= 2)
    at least two blocks on the parallel axis (feeds both v7x TensorCores)."""
    min_lt = min(L, _LANE)
    best = 1
    for d in range(1, B + 1):
        if B % d:
            continue
        if d * C * min_lt * itemsize > budget:
            continue
        if B >= 2 and (B // d) < 2:
            continue
        best = d
    # Note: B == 1 leaves one v7x core idle; splitting L across cores with a
    # combine step is possible but not implemented here.
    return best


def _pick_lt(L, C, Bb, itemsize, budget, l_tile_cap):
    """Largest lane-dense (multiple-of-128) L tile within the VMEM budget."""
    full_ok = Bb * C * L * itemsize <= budget
    if full_ok and (l_tile_cap is None or L <= l_tile_cap):
        return L                                   # single full-extent block
    lt = (budget // (Bb * C * itemsize)) // _LANE * _LANE
    lt = max(lt, _LANE)
    if l_tile_cap is not None:
        lt = min(lt, max(_LANE, (l_tile_cap // _LANE) * _LANE))
    if lt >= L:
        lt = L
    return lt


def channel_attention(x, w1t, w2t, *, l_tile=None, block_budget_bytes=8 << 20):
    """CBAM ChannelAttention forward.

    x:   (B, C, L)
    w1t: (C, H)  == fc1.weight (H, C, 1) squeezed + pre-transposed (hoisted)
    w2t: (H, C)  == fc2.weight (C, H, 1) squeezed + pre-transposed (hoisted)
    returns (B, C, 1) sigmoid attention weights (same dtype as x).
    """
    B, C, L = x.shape
    H = w1t.shape[1]
    assert w1t.shape == (C, H) and w2t.shape == (H, C)

    itemsize = jnp.dtype(x.dtype).itemsize
    w_itemsize = jnp.dtype(w1t.dtype).itemsize

    Bb = _pick_bb(B, C, L, itemsize, block_budget_bytes)
    num_b = B // Bb
    Lt = _pick_lt(L, C, Bb, itemsize, block_budget_bytes, l_tile)
    num_l = pl.cdiv(L, Lt)
    need_mask = (L % Lt) != 0

    # Explicit scoped-VMEM limit: double-buffered x blocks + resident weights +
    # scratch + output block + slack.  Explicit so larger tiles also work on
    # v5e's 16 MiB scoped default; capped well under v7x's 64 MiB physical VMEM.
    x_block_bytes = Bb * C * Lt * itemsize
    vmem_limit = (2 * x_block_bytes + 4 * C * H * w_itemsize
                  + 2 * Bb * C * 4 + 2 * Bb * C * itemsize + (4 << 20))
    vmem_limit = int(min(max(vmem_limit, 16 << 20), 48 << 20))

    cost = pl.CostEstimate(
        flops=2 * B * C * L + 8 * B * C * H,
        transcendentals=B * C,
        bytes_accessed=(B * C * L * itemsize + 2 * C * H * w_itemsize
                        + B * C * itemsize),
    )

    if num_l == 1:
        kernel = _make_single_step_kernel(L)
        grid = (num_b,)
        in_specs = [
            pl.BlockSpec((Bb, C, L), lambda b: (b, 0, 0)),
            pl.BlockSpec((C, H), lambda b: (0, 0)),            # resident weights
            pl.BlockSpec((H, C), lambda b: (0, 0)),            # resident weights
        ]
        out_specs = pl.BlockSpec((1, Bb, C), lambda b: (b, 0, 0))
        scratch_shapes = []
        dims = ("parallel",)
    else:
        kernel = _make_streaming_kernel(L, Lt, need_mask)
        grid = (num_b, num_l)
        in_specs = [
            pl.BlockSpec((Bb, C, Lt), lambda b, l: (b, 0, l)),
            pl.BlockSpec((C, H), lambda b, l: (0, 0)),         # resident weights
            pl.BlockSpec((H, C), lambda b, l: (0, 0)),         # resident weights
        ]
        out_specs = pl.BlockSpec((1, Bb, C), lambda b, l: (b, 0, 0))
        scratch_shapes = [pltpu.VMEM((Bb, C), jnp.float32),    # running sum
                          pltpu.VMEM((Bb, C), jnp.float32)]    # running max
        dims = ("parallel", "arbitrary")

    out = pl.pallas_call(
        kernel,
        out_shape=jax.ShapeDtypeStruct((num_b, Bb, C), x.dtype),
        grid_spec=pltpu.PrefetchScalarGridSpec(
            num_scalar_prefetch=0,
            grid=grid,
            in_specs=in_specs,
            out_specs=out_specs,
            scratch_shapes=scratch_shapes),
        compiler_params=pltpu.CompilerParams(
            dimension_semantics=dims,
            vmem_limit_bytes=vmem_limit),
        cost_estimate=cost,
    )(x, w1t, w2t)

    # (num_b, Bb, C) -> (B, C, 1), matching the PyTorch output shape.
    return out.reshape(B, C, 1)


def reference(x, w1, w2):
    """Pure-JAX reference with PyTorch-layout weights w1:(H,C), w2:(C,H)."""
    xf = x.astype(jnp.float32)
    avg = jnp.mean(xf, axis=-1)
    mx = jnp.max(xf, axis=-1)
    w1f = w1.astype(jnp.float32)
    w2f = w2.astype(jnp.float32)
    mlp = lambda p: jnp.maximum(p @ w1f.T, 0.0) @ w2f.T
    return jax.nn.sigmoid(mlp(avg) + mlp(mx))[:, :, None].astype(x.dtype)


if __name__ == "__main__":
    C, reduction = 64, 16
    H = C // reduction  # 4

    key = jax.random.PRNGKey(0)
    kx1, kx2, kx3, k1, k2 = jax.random.split(key, 5)

    # Conv1d(k=1, bias=False) weights, kernel dim squeezed (PyTorch layout).
    w1 = jax.random.normal(k1, (H, C), dtype=jnp.float32) * 0.1   # fc1: (C//r, C)
    w2 = jax.random.normal(k2, (C, H), dtype=jnp.float32) * 0.1   # fc2: (C, C//r)
    # One-time hoisted transposes into the layout the kernel consumes.
    w1t = jnp.transpose(w1)  # (C, H)
    w2t = jnp.transpose(w2)  # (H, C)

    # 1) Small L: single-step path (full-extent L block, no scratch).
    x1 = jax.random.normal(kx1, (2, C, 16), dtype=jnp.float32)
    o1 = jax.block_until_ready(channel_attention(x1, w1t, w2t))
    assert o1.shape == (2, C, 1)
    assert jnp.allclose(o1, reference(x1, w1, w2), atol=1e-5, rtol=1e-5)

    # 2) Streaming path with a masked remainder tile (two full 1024-wide tiles
    #    + one 256-wide tail) and two parallel B blocks (Bb=1, num_b=2).
    x2 = jax.random.normal(kx2, (2, C, 2304), dtype=jnp.float32)
    o2 = jax.block_until_ready(channel_attention(x2, w1t, w2t, l_tile=1024))
    assert o2.shape == (2, C, 1)
    assert jnp.allclose(o2, reference(x2, w1, w2), atol=1e-5, rtol=1e-5)

    # 3) Streaming path without masking (L divisible by the tile), Bb=8.
    x3 = jax.random.normal(kx3, (16, C, 2048), dtype=jnp.float32)
    o3 = jax.block_until_ready(channel_attention(x3, w1t, w2t, l_tile=1024))
    assert o3.shape == (16, C, 1)
    assert jnp.allclose(o3, reference(x3, w1, w2), atol=1e-5, rtol=1e-5)

    print("KERNEL_OK")
</pallas_src>

<mosaic_0001>
module attributes {stable_mosaic.version = 11 : i64} {
  func.func @kernel(%arg0: i32, %arg1: memref<1x64x16xf32, #tpu.memory_space<vmem>>, %arg2: memref<64x4xf32, #tpu.memory_space<vmem>>, %arg3: memref<4x64xf32, #tpu.memory_space<vmem>>, %arg4: memref<1x1x64xf32, #tpu.memory_space<vmem>>) attributes {dimension_semantics = [#tpu.dimension_semantics<parallel>], iteration_bounds = array<i64: 2>, scalar_prefetch = 0 : i64, scratch_operands = 0 : i64, tpu.core_type = #tpu.core_type<tc>, window_params = [{transform_indices = @transform_0, window_bounds = array<i64: 1, 64, 16>}, {pipeline_mode = #tpu.pipeline_mode<synchronous>, transform_indices = @transform_1, window_bounds = array<i64: 64, 4>}, {pipeline_mode = #tpu.pipeline_mode<synchronous>, transform_indices = @transform_2, window_bounds = array<i64: 4, 64>}, {transform_indices = @transform_3, window_bounds = array<i64: 1, 1, 64>}]} {
    %c0 = arith.constant 0 : index
    %c0_0 = arith.constant 0 : index
    %c0_1 = arith.constant 0 : index
    %0 = vector.load %arg1[%c0, %c0_0, %c0_1] : memref<1x64x16xf32, #tpu.memory_space<vmem>>, vector<1x64x16xf32>
    %cst = arith.constant dense<0.000000e+00> : vector<1x64xf32>
    %1 = vector.multi_reduction <add>, %0, %cst [2] : vector<1x64x16xf32> to vector<1x64xf32>
    %cst_2 = arith.constant dense<0xFF800000> : vector<1x64xf32>
    %2 = vector.multi_reduction <maximumf>, %0, %cst_2 [2] : vector<1x64x16xf32> to vector<1x64xf32>
    %cst_3 = arith.constant 6.250000e-02 : f32
    %3 = vector.broadcast %cst_3 : f32 to vector<1x64xf32>
    %4 = arith.mulf %1, %3 : vector<1x64xf32>
    %5 = tpu.concatenate %4, %2 in 0 : vector<1x64xf32>, vector<1x64xf32> -> vector<2x64xf32>
    %c0_4 = arith.constant 0 : index
    %c0_5 = arith.constant 0 : index
    %6 = vector.load %arg2[%c0_4, %c0_5] : memref<64x4xf32, #tpu.memory_space<vmem>>, vector<64x4xf32>
    %c0_6 = arith.constant 0 : index
    %c0_7 = arith.constant 0 : index
    %7 = vector.load %arg3[%c0_6, %c0_7] : memref<4x64xf32, #tpu.memory_space<vmem>>, vector<4x64xf32>
    %cst_8 = arith.constant dense<0.000000e+00> : vector<2x4xf32>
    %8 = tpu.matmul %5, %6, %cst_8 {dimension_numbers = #tpu.dot_dimension_numbers<[1], [0], [0], [1], [0, 0, 1, 1], [], []>} : vector<2x64xf32>, vector<64x4xf32>, vector<2x4xf32> -> vector<2x4xf32>
    %cst_9 = arith.constant 0.000000e+00 : f32
    %9 = vector.broadcast %cst_9 : f32 to vector<2x4xf32>
    %10 = arith.maximumf %8, %9 : vector<2x4xf32>
    %cst_10 = arith.constant dense<0.000000e+00> : vector<2x64xf32>
    %11 = tpu.matmul %10, %7, %cst_10 {dimension_numbers = #tpu.dot_dimension_numbers<[1], [0], [0], [1], [0, 0, 1, 1], [], []>} : vector<2x4xf32>, vector<4x64xf32>, vector<2x64xf32> -> vector<2x64xf32>
    %12 = vector.extract_strided_slice %11 {offsets = [0, 0], sizes = [1, 64], strides = [1, 1]} : vector<2x64xf32> to vector<1x64xf32>
    %13 = vector.extract_strided_slice %11 {offsets = [1, 0], sizes = [1, 64], strides = [1, 1]} : vector<2x64xf32> to vector<1x64xf32>
    %14 = arith.addf %12, %13 : vector<1x64xf32>
    %15 = arith.negf %14 : vector<1x64xf32>
    %16 = math.exp %15 : vector<1x64xf32>
    %cst_11 = arith.constant 1.000000e+00 : f32
    %17 = vector.broadcast %cst_11 : f32 to vector<1x64xf32>
    %18 = arith.addf %17, %16 : vector<1x64xf32>
    %19 = arith.divf %17, %18 : vector<1x64xf32>
    %c0_12 = arith.constant 0 : index
    %c0_13 = arith.constant 0 : index
    %c0_14 = arith.constant 0 : index
    %20 = vector.load %arg4[%c0_12, %c0_13, %c0_14] : memref<1x1x64xf32, #tpu.memory_space<vmem>>, vector<1x1x64xf32>
    %21 = vector.shape_cast %20 : vector<1x1x64xf32> to vector<1x64xf32>
    %22 = vector.shape_cast %19 : vector<1x64xf32> to vector<1x1x64xf32>
    tpu.vector_store %arg4[%c0_12, %c0_13, %c0_14], %22 {strides = array<i32>} : memref<1x1x64xf32, #tpu.memory_space<vmem>>, vector<1x1x64xf32>,
    return
  }
  func.func @transform_0(%arg0: i32) -> (i32, i32, i32) {
    %c0_i32 = arith.constant 0 : i32
    %c0_i32_0 = arith.constant 0 : i32
    %c0_i32_1 = arith.constant 0 : i32
    return %arg0, %c0_i32, %c0_i32_0 : i32, i32, i32
  }
  func.func @transform_1(%arg0: i32) -> (i32, i32) {
    %c0_i32 = arith.constant 0 : i32
    %c0_i32_0 = arith.constant 0 : i32
    %c0_i32_1 = arith.constant 0 : i32
    return %c0_i32, %c0_i32_0 : i32, i32
  }
  func.func @transform_2(%arg0: i32) -> (i32, i32) {
    %c0_i32 = arith.constant 0 : i32
    %c0_i32_0 = arith.constant 0 : i32
    %c0_i32_1 = arith.constant 0 : i32
    return %c0_i32, %c0_i32_0 : i32, i32
  }
  func.func @transform_3(%arg0: i32) -> (i32, i32, i32) {
    %c0_i32 = arith.constant 0 : i32
    %c0_i32_0 = arith.constant 0 : i32
    %c0_i32_1 = arith.constant 0 : i32
    return %arg0, %c0_i32, %c0_i32_0 : i32, i32, i32
  }
}

</mosaic_0001>

<llo_original>
// kernel: tpu_custom_call.1
$region0: #{tpu_custom_call.1}
  #allocation0 [shape = 'u32[]', space=smem, size = 0x4, offset = 0x4, fixed_abs, tag = 'smem constant byte address 0x4 - core index']
  #allocation1 [shape = 'u32[144,128]{1,0:T(1,128)}', space=vmem, size = 0x12000, scoped, tag = 'internal scratch']
  %s0 = inlined_call_operand.vmem [shape: f32[2,64,16], index: 0, kind: input, shape index: {}]
  %s1 = inlined_call_operand.vmem [shape: f32[64,4], index: 1, kind: input, shape index: {}]
  %s2 = inlined_call_operand.vmem [shape: f32[4,64], index: 2, kind: input, shape index: {}]
  %s3 = inlined_call_operand.hbm [shape: f32[2,1,64], index: 3, kind: output, shape index: {}]
  %s4 = sld [smem:[#allocation0]]
  $region45: #{tpu_custom_call.1} parent=0
    _
  %s6 = ssub.s32 1, %s4
  %s7 = scalar_select 0, %s6, %s4
  $region1: #{tpu_custom_call.1} parent=0
    #allocation2 [shape = 'u8[1024]{0}', space=vmem, size = 0x400, scoped, tag = 'output window, operand 0']
    #allocation3 [shape = 's32[2]{0}', space=sflag, size = 0x8, scoped, tag = 'scoped memory for tpu_custom_call.1']
    %8 = vsyncpa [#allocation3], 0
    %s9 = scalar_lea.sflag [#allocation3], 1
    %10 = vsyncpa %s9, 0
    loop: start=0, step=1, limit=4
    $region2: #{tpu_custom_call.1} parent=1 // loop_pre_header
      _
    $region3: #{tpu_custom_call.1} parent=1 // loop_header
      %s12 = sphi 0, %s16
      %p13 = scmp.ge.s32.totalorder %s12, 4
      %s22 = sphi 0, %s24
      %s25 = sphi 0, %s22
      %s26 = sphi 0, %s25
      %s42 = sphi 0, %s26
      %s46 = sphi 0, %s46
      %s48 = sphi 0, %s46
      %s49 = sphi 0, %s48
      %s63 = sphi 0, %s49
      %s67 = sphi 0, %s67
      %s69 = sphi 0, %s67
      %s70 = sphi 0, %s69
      %s84 = sphi 0, %s70
      %s90 = sphi 0, %s92
      %s93 = sphi 0, %s90
      %s94 = sphi 0, %s93
      %s110 = sphi 0, %s94
    $region4: #{tpu_custom_call.1} parent=1 // loop_header_branch
      %15 = sbr.rel (%p13) target = $region8
    $region5: #{tpu_custom_call.1} parent=1 // loop_body
      %s17 = ssub.s32 %s12, 1
      %s18 = ssub.s32 %s12, 2
      %s19 = sadd.s32 %s12, 1
      %s20 = ssub.s32 %s12, %s19
      %p21 = scmp.eq.s32.totalorder %s20, 0
      %s23 = sadd.s32 %s22, 1
      %s24 = scalar_select %p21, %s22, %s23
      %p27 = pneg %p21
      %p28 = scmp.eq.s32.totalorder %s12, 1
      %p29 = por %p27, %p28
      %p30 = scmp.ne.s32.totalorder %s22, %s25
      %p31 = scmp.eq.s32.totalorder %s12, 0
      %p32 = por %p30, %p31
      %p33 = scmp.ne.s32.totalorder %s22, %s25
      %p34 = scmp.eq.s32.totalorder %s17, 1
      %p35 = por %p33, %p34
      %p36 = scmp.ne.s32.totalorder %s25, %s26
      %p37 = scmp.eq.s32.totalorder %s17, 0
      %p38 = por %p36, %p37
      %p39 = scmp.ne.s32.totalorder %s25, %s26
      %p40 = scmp.eq.s32.totalorder %s18, 1
      %p41 = por %p39, %p40
      %p43 = scmp.ne.s32.totalorder %s26, %s42
      %p44 = scmp.eq.s32.totalorder %s18, 0
      %p45 = por %p43, %p44
      %s47 = sadd.s32 %s46, 1
      %p50 = scmp.eq.s32.totalorder %s12, 1
      %p51 = scmp.ne.s32.totalorder %s46, %s48
      %p52 = scmp.eq.s32.totalorder %s12, 0
      %p53 = por %p51, %p52
      %p54 = scmp.ne.s32.totalorder %s46, %s48
      %p55 = scmp.eq.s32.totalorder %s17, 1
      %p56 = por %p54, %p55
      %p57 = scmp.ne.s32.totalorder %s48, %s49
      %p58 = scmp.eq.s32.totalorder %s17, 0
      %p59 = por %p57, %p58
      %p60 = scmp.ne.s32.totalorder %s48, %s49
      %p61 = scmp.eq.s32.totalorder %s18, 1
      %p62 = por %p60, %p61
      %p64 = scmp.ne.s32.totalorder %s49, %s63
      %p65 = scmp.eq.s32.totalorder %s18, 0
      %p66 = por %p64, %p65
      %s68 = sadd.s32 %s67, 1
      %p71 = scmp.eq.s32.totalorder %s12, 1
      %p72 = scmp.ne.s32.totalorder %s67, %s69
      %p73 = scmp.eq.s32.totalorder %s12, 0
      %p74 = por %p72, %p73
      %p75 = scmp.ne.s32.totalorder %s67, %s69
      %p76 = scmp.eq.s32.totalorder %s17, 1
      %p77 = por %p75, %p76
      %p78 = scmp.ne.s32.totalorder %s69, %s70
      %p79 = scmp.eq.s32.totalorder %s17, 0
      %p80 = por %p78, %p79
      %p81 = scmp.ne.s32.totalorder %s69, %s70
      %p82 = scmp.eq.s32.totalorder %s18, 1
      %p83 = por %p81, %p82
      %p85 = scmp.ne.s32.totalorder %s70, %s84
      %p86 = scmp.eq.s32.totalorder %s18, 0
      %p87 = por %p85, %p86
      %s88 = ssub.s32 %s12, %s19
      %p89 = scmp.eq.s32.totalorder %s88, 0
      %s91 = sadd.s32 %s90, 1
      %s92 = scalar_select %p89, %s90, %s91
      %p95 = pneg %p89
      %p96 = scmp.eq.s32.totalorder %s12, 1
      %p97 = por %p95, %p96
      %p98 = scmp.ne.s32.totalorder %s90, %s93
      %p99 = scmp.eq.s32.totalorder %s12, 0
      %p100 = por %p98, %p99
      %p101 = scmp.ne.s32.totalorder %s90, %s93
      %p102 = scmp.eq.s32.totalorder %s17, 1
      %p103 = por %p101, %p102
      %p104 = scmp.ne.s32.totalorder %s93, %s94
      %p105 = scmp.eq.s32.totalorder %s17, 0
      %p106 = por %p104, %p105
      %p107 = scmp.ne.s32.totalorder %s93, %s94
      %p108 = scmp.eq.s32.totalorder %s18, 1
      %p109 = por %p107, %p108
      %p111 = scmp.ne.s32.totalorder %s94, %s110
      %p112 = scmp.eq.s32.totalorder %s18, 0
      %p113 = por %p111, %p112
      %p114 = scmp.le.s32.totalorder 1, %s12
      %p115 = scmp.lt.s32.totalorder %s12, 3
      %p116 = pnand %p114, %p115
      %p117 = pneg %p116
      // Predicated region
      $region9: #{tpu_custom_call.1} parent=5 // pred_check
        _
      $region10: #{tpu_custom_call.1} parent=5 // pred_check_branch
        %119 = sbr.rel (%p116) target = $region12
      $region11: #{tpu_custom_call.1} parent=5 // pred_region
        %s120 = ssub.s32 %s12, 1
        // Predicated region
        $region13: #{tpu_custom_call.1} parent=11 // pred_check
          %p121 = pneg %p59
        $region14: #{tpu_custom_call.1} parent=11 // pred_check_branch
          %123 = sbr.rel (%p121) target = $region16
        $region15: #{tpu_custom_call.1} parent=11 // pred_region
          _
        $region16: #{tpu_custom_call.1} parent=11 // pred_fallthru
          _
        // Predicated region
        $region17: #{tpu_custom_call.1} parent=11 // pred_check
          %p124 = pneg %p80
        $region18: #{tpu_custom_call.1} parent=11 // pred_check_branch
          %126 = sbr.rel (%p124) target = $region20
        $region19: #{tpu_custom_call.1} parent=11 // pred_region
          _
        $region20: #{tpu_custom_call.1} parent=11 // pred_fallthru
          _
      $region12: #{tpu_custom_call.1} parent=5 // pred_fallthru
        _
      %p127 = scmp.lt.s32.totalorder %s12, 2
      // Predicated region
      $region21: #{tpu_custom_call.1} parent=5 // pred_check
        %p128 = pneg %p127
      $region22: #{tpu_custom_call.1} parent=5 // pred_check_branch
        %130 = sbr.rel (%p128) target = $region24
      $region23: #{tpu_custom_call.1} parent=5 // pred_region
        // Predicated region
        $region25: #{tpu_custom_call.1} parent=23 // pred_check
          %p131 = pneg %p32
        $region26: #{tpu_custom_call.1} parent=23 // pred_check_branch
          %133 = sbr.rel (%p131) target = $region28
        $region27: #{tpu_custom_call.1} parent=23 // pred_region
          %p134 = scmp.lt.s32.totalorder %s12, 1
          %s135 = scalar_select %p134, %s12, 1
          %s136 = smul.addr %s135, 8
          %s137 = smul.addr %s136, 8
          %s138 = scalar_lea.vmem %s0, %s137
        $region28: #{tpu_custom_call.1} parent=23 // pred_fallthru
          _
      $region24: #{tpu_custom_call.1} parent=5 // pred_fallthru
        _
      %p139 = scmp.le.s32.totalorder 1, %s12
      %p140 = scmp.lt.s32.totalorder %s12, 3
      %p141 = pnand %p139, %p140
      %p142 = pneg %p141
      // Predicated region
      $region29: #{tpu_custom_call.1} parent=5 // pred_check
        _
      $region30: #{tpu_custom_call.1} parent=5 // pred_check_branch
        %144 = sbr.rel (%p141) target = $region32
      $region31: #{tpu_custom_call.1} parent=5 // pred_region
        %s145 = ssub.s32 %s12, 1
        %p146 = scmp.lt.s32.totalorder %s17, 1
        %s147 = scalar_select %p146, %s17, 1
        %s148 = smul.addr %s147, 8
        %s149 = smul.addr %s148, 8
        %s150 = scalar_lea.vmem %s0, %s149
        %p151 = pneg %p38
        %p152 = pneg %p35
        %p153 = pneg %p59
        %p154 = pneg %p56
        %p155 = pneg %p80
        %p156 = pneg %p77
        %p157 = pneg %p106
        %p158 = pneg %p103
        %s159 = sand.u32 %s93, 1
        %s160 = scalar_lea.sflag [#allocation3], %s159
        %s161 = sand.u32 %s93, 1
        %s162 = scalar_lea.vmem [#allocation2], %s161
        %p163 = scmp.lt.s32.totalorder %s17, 1
        %s164 = scalar_select %p163, %s17, 1
        %s165 = smul.addr %s164, 8
        %s166 = smul.addr %s165, 8
        %s167 = scalar_lea.vmem %s0, %s166
        %v168 = vld [vmem:[%s167] sm:$0xff]
        %v169 = vld [vmem:[%s167 + $0x8] sm:$0xff]
        %v170 = vld [vmem:[%s167 + $0x10] sm:$0xff]
        %v171 = vld [vmem:[%s167 + $0x18] sm:$0xff]
        %v172 = vld [vmem:[%s167 + $0x20] sm:$0xff]
        %v173 = vld [vmem:[%s167 + $0x28] sm:$0xff]
        %v174 = vld [vmem:[%s167 + $0x30] sm:$0xff]
        %v175 = vld [vmem:[%s167 + $0x38] sm:$0xff]
        %vm176 = vcmask 130048
        %v177 = vsel %vm176, %v168, 0.0
        %178 = vadd.xlane.f32.xlu0 %v177
        %v179 = vpop.xlane.xlu0 %178
        %v180 = vsel %vm176, %v169, 0.0
        %181 = vadd.xlane.f32.xlu0 %v180
        %v182 = vpop.xlane.xlu0 %181
        %v183 = vsel %vm176, %v170, 0.0
        %184 = vadd.xlane.f32.xlu0 %v183
        %v185 = vpop.xlane.xlu0 %184
        %v186 = vsel %vm176, %v171, 0.0
        %187 = vadd.xlane.f32.xlu0 %v186
        %v188 = vpop.xlane.xlu0 %187
        %v189 = vsel %vm176, %v172, 0.0
        %190 = vadd.xlane.f32.xlu0 %v189
        %v191 = vpop.xlane.xlu0 %190
        %v192 = vsel %vm176, %v173, 0.0
        %193 = vadd.xlane.f32.xlu0 %v192
        %v194 = vpop.xlane.xlu0 %193
        %v195 = vsel %vm176, %v174, 0.0
        %196 = vadd.xlane.f32.xlu0 %v195
        %v197 = vpop.xlane.xlu0 %196
        %v198 = vsel %vm176, %v175, 0.0
        %199 = vadd.xlane.f32.xlu0 %v198
        %v200 = vpop.xlane.xlu0 %199
        %v201 = vsel %vm176, %v168, -inf
        %202 = vmax.xlane.f32.xlu0 %v201
        %v203 = vpop.xlane.xlu0 %202
        %v204 = vsel %vm176, %v169, -inf
        %205 = vmax.xlane.f32.xlu0 %v204
        %v206 = vpop.xlane.xlu0 %205
        %v207 = vsel %vm176, %v170, -inf
        %208 = vmax.xlane.f32.xlu0 %v207
        %v209 = vpop.xlane.xlu0 %208
        %v210 = vsel %vm176, %v171, -inf
        %211 = vmax.xlane.f32.xlu0 %v210
        %v212 = vpop.xlane.xlu0 %211
        %v213 = vsel %vm176, %v172, -inf
        %214 = vmax.xlane.f32.xlu0 %v213
        %v215 = vpop.xlane.xlu0 %214
        %v216 = vsel %vm176, %v173, -inf
        %217 = vmax.xlane.f32.xlu0 %v216
        %v218 = vpop.xlane.xlu0 %217
        %v219 = vsel %vm176, %v174, -inf
        %220 = vmax.xlane.f32.xlu0 %v219
        %v221 = vpop.xlane.xlu0 %220
        %v222 = vsel %vm176, %v175, -inf
        %223 = vmax.xlane.f32.xlu0 %v222
        %v224 = vpop.xlane.xlu0 %223
        %v225 = vmul.f32 %v179, 0.0625
        %v226 = vmul.f32 %v182, 0.0625
        %v227 = vmul.f32 %v185, 0.0625
        %v228 = vmul.f32 %v188, 0.0625
        %v229 = vmul.f32 %v191, 0.0625
        %v230 = vmul.f32 %v194, 0.0625
        %v231 = vmul.f32 %v197, 0.0625
        %v232 = vmul.f32 %v200, 0.0625
        %v241 = vlaneseq
        %v242 = vand.u32 %v241, 127
        %v243 = vlaneseq
        %v244 = vshrl.u32 %v243, 7
        %v245 = vsub.s32 %v242, %v244
        %v246 = vrot.slane %v225, %v245
        %v247 = vadd.s32 %v242, 4294967288
        %v248 = vlaneseq
        %v249 = vshrl.u32 %v248, 7
        %v250 = vsub.s32 %v247, %v249
        %v251 = vrot.slane %v226, %v250
        %vm252 = vcmask 130112
        %v253 = vsel %vm252, %v251, %v246
        %v254 = vadd.s32 %v242, 4294967280
        %v255 = vlaneseq
        %v256 = vshrl.u32 %v255, 7
        %v257 = vsub.s32 %v254, %v256
        %v258 = vrot.slane %v227, %v257
        %vm259 = vcmask 195712
        %v260 = vsel %vm259, %v258, %v253
        %v261 = vadd.s32 %v242, 4294967272
        %v262 = vlaneseq
        %v263 = vshrl.u32 %v262, 7
        %v264 = vsub.s32 %v261, %v263
        %v265 = vrot.slane %v228, %v264
        %vm266 = vcmask 261312
        %v267 = vsel %vm266, %v265, %v260
        %v268 = vadd.s32 %v242, 4294967264
        %v269 = vlaneseq
        %v270 = vshrl.u32 %v269, 7
        %v271 = vsub.s32 %v268, %v270
        %v272 = vrot.slane %v229, %v271
        %vm273 = vcmask 326912
        %v274 = vsel %vm273, %v272, %v267
        %v275 = vadd.s32 %v242, 4294967256
        %v276 = vlaneseq
        %v277 = vshrl.u32 %v276, 7
        %v278 = vsub.s32 %v275, %v277
        %v279 = vrot.slane %v230, %v278
        %vm280 = vcmask 392512
        %v281 = vsel %vm280, %v279, %v274
        %v282 = vadd.s32 %v242, 4294967248
        %v283 = vlaneseq
        %v284 = vshrl.u32 %v283, 7
        %v285 = vsub.s32 %v282, %v284
        %v286 = vrot.slane %v231, %v285
        %vm287 = vcmask 458112
        %v288 = vsel %vm287, %v286, %v281
        %v289 = vadd.s32 %v242, 4294967240
        %v290 = vlaneseq
        %v291 = vshrl.u32 %v290, 7
        %v292 = vsub.s32 %v289, %v291
        %v293 = vrot.slane %v232, %v292
        %vm294 = vcmask 523712
        %v295 = vsel %vm294, %v293, %v288
        %v305 = vlaneseq
        %v306 = vshrl.u32 %v305, 7
        %v307 = vsub.s32 %v242, %v306
        %v308 = vrot.slane %v203, %v307
        %v309 = vlaneseq
        %v310 = vshrl.u32 %v309, 7
        %v311 = vsub.s32 %v247, %v310
        %v312 = vrot.slane %v206, %v311
        %v313 = vsel %vm252, %v312, %v308
        %v314 = vlaneseq
        %v315 = vshrl.u32 %v314, 7
        %v316 = vsub.s32 %v254, %v315
        %v317 = vrot.slane %v209, %v316
        %v318 = vsel %vm259, %v317, %v313
        %v319 = vlaneseq
        %v320 = vshrl.u32 %v319, 7
        %v321 = vsub.s32 %v261, %v320
        %v322 = vrot.slane %v212, %v321
        %v323 = vsel %vm266, %v322, %v318
        %v324 = vlaneseq
        %v325 = vshrl.u32 %v324, 7
        %v326 = vsub.s32 %v268, %v325
        %v327 = vrot.slane %v215, %v326
        %v328 = vsel %vm273, %v327, %v323
        %v329 = vlaneseq
        %v330 = vshrl.u32 %v329, 7
        %v331 = vsub.s32 %v275, %v330
        %v332 = vrot.slane %v218, %v331
        %v333 = vsel %vm280, %v332, %v328
        %v334 = vlaneseq
        %v335 = vshrl.u32 %v334, 7
        %v336 = vsub.s32 %v282, %v335
        %v337 = vrot.slane %v221, %v336
        %v338 = vsel %vm287, %v337, %v333
        %v339 = vlaneseq
        %v340 = vshrl.u32 %v339, 7
        %v341 = vsub.s32 %v289, %v340
        %v342 = vrot.slane %v224, %v341
        %v343 = vsel %vm294, %v342, %v338
        %vm345 = vcmask 1040384
        %v346 = vsel %vm345, %v295, %v343
        %v347 = vld [vmem:[%s1] sm:$0xff]
        %v348 = vld [vmem:[%s1 + $0x8] sm:$0xff]
        %v349 = vld [vmem:[%s1 + $0x10] sm:$0xff]
        %v350 = vld [vmem:[%s1 + $0x18] sm:$0xff]
        %v351 = vld [vmem:[%s1 + $0x20] sm:$0xff]
        %v352 = vld [vmem:[%s1 + $0x28] sm:$0xff]
        %v353 = vld [vmem:[%s1 + $0x30] sm:$0xff]
        %v354 = vld [vmem:[%s1 + $0x38] sm:$0xff]
        %v355 = vld [vmem:[%s2] sm:$0xf]
        %vm356 = vcmask 523264
        %v358 = vsel %vm356, %v346, 0
        %360 = vmatprep.subr.mxu0 0.0
        %361 = vmatpush1.msra.mxu0 0.0
        %362 = vmatprep.subr.mxu0 0.0
        %363 = vmatpush1.msra.mxu0 0.0
        %364 = vmatprep.subr.mxu0 0.0
        %365 = vmatpush1.msra.mxu0 0.0
        %366 = vmatprep.subr.mxu0 0.0
        %367 = vmatpush1.msra.mxu0 0.0
        %368 = vmatprep.subr.mxu0 0.0
        %369 = vmatpush1.msra.mxu0 0.0
        %370 = vmatprep.subr.mxu0 0.0
        %371 = vmatpush1.msra.mxu0 0.0
        %372 = vmatprep.subr.mxu0 0.0
        %373 = vmatpush1.msra.mxu0 0.0
        %374 = vmatprep.subr.mxu0 0.0
        %375 = vmatpush1.msra.mxu0 0.0
        %376 = vmatprep.subr.mxu0 0.0
        %377 = vmatpush1.msra.mxu0 %v354
        %378 = vmatprep.subr.mxu0 0.0
        %379 = vmatpush1.msra.mxu0 %v353
        %380 = vmatprep.subr.mxu0 0.0
        %381 = vmatpush1.msra.mxu0 %v352
        %382 = vmatprep.subr.mxu0 0.0
        %383 = vmatpush1.msra.mxu0 %v351
        %384 = vmatprep.subr.mxu0 0.0
        %385 = vmatpush1.msra.mxu0 %v350
        %386 = vmatprep.subr.mxu0 0.0
        %387 = vmatpush1.msra.mxu0 %v349
        %388 = vmatprep.subr.mxu0 0.0
        %389 = vmatpush1.msra.mxu0 %v348
        %390 = vmatprep.subr.mxu0 0.0
        %391 = vmatpush1.msra.mxu0 %v347
        %392 = vmatprep.subr.mxu0 0.0
        %393 = vmatpush2.msra.mxu0 0.0
        %394 = vmatprep.subr.mxu0 0.0
        %395 = vmatpush2.msra.mxu0 0.0
        %396 = vmatprep.subr.mxu0 0.0
        %397 = vmatpush2.msra.mxu0 0.0
        %398 = vmatprep.subr.mxu0 0.0
        %399 = vmatpush2.msra.mxu0 0.0
        %400 = vmatprep.subr.mxu0 0.0
        %401 = vmatpush2.msra.mxu0 0.0
        %402 = vmatprep.subr.mxu0 0.0
        %403 = vmatpush2.msra.mxu0 0.0
        %404 = vmatprep.subr.mxu0 0.0
        %405 = vmatpush2.msra.mxu0 0.0
        %406 = vmatprep.subr.mxu0 0.0
        %407 = vmatpush2.msra.mxu0 0.0
        %408 = vmatprep.subr.mxu0 0.0
        %409 = vmatpush2.msra.mxu0 0.0
        %410 = vmatprep.subr.mxu0 0.0
        %411 = vmatpush2.msra.mxu0 0.0
        %412 = vmatprep.subr.mxu0 0.0
        %413 = vmatpush2.msra.mxu0 0.0
        %414 = vmatprep.subr.mxu0 0.0
        %415 = vmatpush2.msra.mxu0 0.0
        %416 = vmatprep.subr.mxu0 0.0
        %417 = vmatpush2.msra.mxu0 0.0
        %418 = vmatprep.subr.mxu0 0.0
        %419 = vmatpush2.msra.mxu0 0.0
        %420 = vmatprep.subr.mxu0 0.0
        %421 = vmatpush2.msra.mxu0 0.0
        %422 = vmatprep.subr.mxu0 0.0
        %423 = vmatpush2.msra.mxu0 0.0
        %424 = vmatprep.mubr.f32.mxu0 0.0
        %425 = vmatmul.mubr.f32.gmra.mxu0 %v358
        %v426 = vpop.f32.mrf.mxu0
        %v427 = vadd.f32 0.0, %v426
        %v428 = vpop.f32.mrf.mxu0
        %429 = vdwg.mxu0
        %v430 = vmax.f32 %v427, 0.0
        %vm431 = vcmask 31744
        %v433 = vsel %vm431, %v430, 0
        %vm435 = vcmask 1043456
        %v437 = vsel %vm435, %v355, 0
        %439 = vmatprep.subr.mxu0 0.0
        %440 = vmatpush1.msra.mxu0 0.0
        %441 = vmatprep.subr.mxu0 0.0
        %442 = vmatpush1.msra.mxu0 0.0
        %443 = vmatprep.subr.mxu0 0.0
        %444 = vmatpush1.msra.mxu0 0.0
        %445 = vmatprep.subr.mxu0 0.0
        %446 = vmatpush1.msra.mxu0 0.0
        %447 = vmatprep.subr.mxu0 0.0
        %448 = vmatpush1.msra.mxu0 0.0
        %449 = vmatprep.subr.mxu0 0.0
        %450 = vmatpush1.msra.mxu0 0.0
        %451 = vmatprep.subr.mxu0 0.0
        %452 = vmatpush1.msra.mxu0 0.0
        %453 = vmatprep.subr.mxu0 0.0
        %454 = vmatpush1.msra.mxu0 0.0
        %455 = vmatprep.subr.mxu0 0.0
        %456 = vmatpush1.msra.mxu0 0.0
        %457 = vmatprep.subr.mxu0 0.0
        %458 = vmatpush1.msra.mxu0 0.0
        %459 = vmatprep.subr.mxu0 0.0
        %460 = vmatpush1.msra.mxu0 0.0
        %461 = vmatprep.subr.mxu0 0.0
        %462 = vmatpush1.msra.mxu0 0.0
        %463 = vmatprep.subr.mxu0 0.0
        %464 = vmatpush1.msra.mxu0 0.0
        %465 = vmatprep.subr.mxu0 0.0
        %466 = vmatpush1.msra.mxu0 0.0
        %467 = vmatprep.subr.mxu0 0.0
        %468 = vmatpush1.msra.mxu0 0.0
        %469 = vmatprep.subr.mxu0 0.0
        %470 = vmatpush1.msra.mxu0 %v437
        %471 = vmatprep.subr.mxu0 0.0
        %472 = vmatpush2.msra.mxu0 0.0
        %473 = vmatprep.subr.mxu0 0.0
        %474 = vmatpush2.msra.mxu0 0.0
        %475 = vmatprep.subr.mxu0 0.0
        %476 = vmatpush2.msra.mxu0 0.0
        %477 = vmatprep.subr.mxu0 0.0
        %478 = vmatpush2.msra.mxu0 0.0
        %479 = vmatprep.subr.mxu0 0.0
        %480 = vmatpush2.msra.mxu0 0.0
        %481 = vmatprep.subr.mxu0 0.0
        %482 = vmatpush2.msra.mxu0 0.0
        %483 = vmatprep.subr.mxu0 0.0
        %484 = vmatpush2.msra.mxu0 0.0
        %485 = vmatprep.subr.mxu0 0.0
        %486 = vmatpush2.msra.mxu0 0.0
        %487 = vmatprep.subr.mxu0 0.0
        %488 = vmatpush2.msra.mxu0 0.0
        %489 = vmatprep.subr.mxu0 0.0
        %490 = vmatpush2.msra.mxu0 0.0
        %491 = vmatprep.subr.mxu0 0.0
        %492 = vmatpush2.msra.mxu0 0.0
        %493 = vmatprep.subr.mxu0 0.0
        %494 = vmatpush2.msra.mxu0 0.0
        %495 = vmatprep.subr.mxu0 0.0
        %496 = vmatpush2.msra.mxu0 0.0
        %497 = vmatprep.subr.mxu0 0.0
        %498 = vmatpush2.msra.mxu0 0.0
        %499 = vmatprep.subr.mxu0 0.0
        %500 = vmatpush2.msra.mxu0 0.0
        %501 = vmatprep.subr.mxu0 0.0
        %502 = vmatpush2.msra.mxu0 0.0
        %503 = vmatprep.mubr.f32.mxu0 0.0
        %504 = vmatmul.mubr.f32.gmra.mxu0 %v433
        %v505 = vpop.f32.mrf.mxu0
        %v506 = vadd.f32 0.0, %v505
        %v507 = vpop.f32.mrf.mxu0
        %508 = vdwg.mxu0
        %v510 = vrot.slane %v506, 1
        %v512 = vadd.f32 %v506, %v510
        %v513 = vxor.u32 %v512, 2147483648
        %v514 = vmul.f32 %v513, 1.442695
        %v515 = vpow.pop %v514
        %v516 = vadd.f32 %v515, 1.0
        %v517 = vrcp.pop %v516
        %v518 = vmul.f32 1.0, %v517
        %vm519 = vcmask 516096
        %520 = vst.msk [vmem:[%s162] sm:$0x1] %vm519, %v518
        %s521 = sand.u32 %s93, 1
        %s522 = scalar_lea.sflag [#allocation3], %s521
        %s523 = sand.u32 %s93, 1
        %s524 = scalar_lea.vmem [#allocation2], %s523
        // Predicated region
        $region33: #{tpu_custom_call.1} parent=31 // pred_check
          %p525 = pneg %p103
        $region34: #{tpu_custom_call.1} parent=31 // pred_check_branch
          %527 = sbr.rel (%p525) target = $region36
        $region35: #{tpu_custom_call.1} parent=31 // pred_region
          %s529 = ssub.s32 16, 16
          %530 = vsyncadd %s522, %s529
          %s531 = smul.addr %s17, 16
          %s532 = scalar_lea.hbm %s3, %s531
          %s534 = sshll.u32 %s524, 4
          %s535 = int_to_ptr.vmem [resolvable:$true] %s534
          %537 = dma.vmem_to_hbm [thread:$0]  %s535, 16, %s532, %s522
        $region36: #{tpu_custom_call.1} parent=31 // pred_fallthru
          _
      $region32: #{tpu_custom_call.1} parent=5 // pred_fallthru
        _
      %p538 = scmp.le.s32.totalorder 2, %s12
      // Predicated region
      $region37: #{tpu_custom_call.1} parent=5 // pred_check
        %p539 = pneg %p538
      $region38: #{tpu_custom_call.1} parent=5 // pred_check_branch
        %541 = sbr.rel (%p539) target = $region40
      $region39: #{tpu_custom_call.1} parent=5 // pred_region
        %s542 = ssub.s32 %s12, 2
        // Predicated region
        $region41: #{tpu_custom_call.1} parent=39 // pred_check
          %p543 = pneg %p109
        $region42: #{tpu_custom_call.1} parent=39 // pred_check_branch
          %545 = sbr.rel (%p543) target = $region44
        $region43: #{tpu_custom_call.1} parent=39 // pred_region
          %s546 = sand.u32 %s94, 1
          %s547 = scalar_lea.sflag [#allocation3], %s546
          %s548 = sand.u32 %s94, 1
          %s549 = scalar_lea.vmem [#allocation2], %s548
          %550 = dma.done %s547, 16
        $region44: #{tpu_custom_call.1} parent=39 // pred_fallthru
          _
      $region40: #{tpu_custom_call.1} parent=5 // pred_fallthru
        _
    $region6: #{tpu_custom_call.1} parent=1 // loop_footer
      %s16 = sadd.s32 1, %s12
    $region7: #{tpu_custom_call.1} parent=1 // loop_footer_branch
      %11 = sbr.rel target = $region3
    $region8: #{tpu_custom_call.1} parent=1 // loop_exit
      _
    %551 = vsyncpa [#allocation3], 1
    %s552 = scalar_lea.sflag [#allocation3], 1
    %553 = vsyncpa %s552, 1

</llo_original>
